<compile_context>
chip_gen: v7x
topology: tpu7x:2x2x1
jax: 0.10.0
libtpu: 0.0.40
codegen_flags: <defaults>
</compile_context>

<pallas_src>
import functools

import jax
import jax.numpy as jnp
from jax.experimental import pallas as pl
from jax.experimental.pallas import tpu as pltpu

_LANES = 128
_SUBLANES = 8


# ------------------------------ sizing helpers --------------------------------

def _round_up(x, m):
    return ((x + m - 1) // m) * m


def _vmem_capacity_bytes():
    try:
        return int(pltpu.get_tpu_info().vmem_capacity_bytes)
    except Exception:
        return 64 * 1024 * 1024  # conservative default (v7x-sized)


def _vmem_limit_bytes():
    cap = _vmem_capacity_bytes()
    # 3/4 of physical VMEM, capped at 96 MiB: 96 MiB on v5e/v6e (128 MiB phys),
    # 48 MiB on v7x (64 MiB phys).  Leaves headroom for compiler scratch.
    return int(min((3 * cap) // 4, 96 * 1024 * 1024))


def _tiling(n_rows, f32_bytes_per_row, n_parallel):
    """Pick (G, rows_block, blocks_per_g, padded_rows) for a (rows, 128) layout.

    n_rows:            unpadded number of 128-lane pixel rows per parallel slice
    f32_bytes_per_row: combined f32-widened bytes of all streamed inputs per row
                       (sizing by the widened footprint bounds both HBM-block and
                        in-register temporaries)
    n_parallel:        size of the existing batch-parallel grid axis
    """
    cap = _vmem_capacity_bytes()
    # Combined per-step budget for all inputs: most aggressive on v7x (fast HBM,
    # small VMEM but we raise the limit), ~8 MiB elsewhere.  Double-buffered this
    # is 2x and stays far below the raised vmem limit on every generation.
    budget = (12 << 20) if cap <= (80 << 20) else (8 << 20)
    # Split the row axis across the two v7x TensorCores when the batch axis alone
    # cannot occupy them (N == 1 or odd N).  No-op on single-TC v5e/v6e.
    G = 2 if (n_parallel % 2 == 1 and n_rows >= 2 * _SUBLANES) else 1
    rows_target = max(_SUBLANES,
                      (budget // max(f32_bytes_per_row, 1)) // _SUBLANES * _SUBLANES)
    rows_per_g = _round_up(-(-n_rows // G), _SUBLANES)
    rows_block = min(rows_target, rows_per_g)
    blocks_per_g = -(-rows_per_g // rows_block)
    padded_rows = G * blocks_per_g * rows_block
    return G, rows_block, blocks_per_g, padded_rows


# --------------------------------- kernels ------------------------------------

def _ce_kernel(logits_ref, t_ref, o_ref, *, pb_per_g, rows_block, valid, needs_mask):
    """Multi-class CE: fused argmax(y_true) pick + stable LSE, per-lane partial sums.

    logits_ref: (C, RB, 128) raw dtype     t_ref: (C, RB, 128) raw dtype
    o_ref:      (1, 128)     f32 running per-lane sum (resident across pixel axis)
    """
    p = pl.program_id(2)

    @pl.when(p == 0)
    def _():
        o_ref[...] = jnp.zeros_like(o_ref)

    logits = logits_ref[...].astype(jnp.float32)          # (C, RB, 128)
    t = t_ref[...].astype(jnp.float32)                    # (C, RB, 128)
    C = logits.shape[0]

    # torch.argmax(y_true, 1) + gather of the matching logit, fused and elementwise.
    # Strict ">" keeps the FIRST maximum (torch/jnp argmax tie-break).
    best_t = t[0]
    picked = logits[0]
    lmax = logits[0]
    for c in range(1, C):
        take = t[c] > best_t
        best_t = jnp.where(take, t[c], best_t)
        picked = jnp.where(take, logits[c], picked)
        lmax = jnp.maximum(lmax, logits[c])

    se = jnp.exp(logits[0] - lmax)
    for c in range(1, C):
        se = se + jnp.exp(logits[c] - lmax)

    loss = lmax + jnp.log(se) - picked                    # (RB, 128)

    if needs_mask:
        g = pl.program_id(1)
        row0 = (g * pb_per_g + p) * rows_block
        rows = row0 + jax.lax.broadcasted_iota(jnp.int32, loss.shape, 0)
        lanes = jax.lax.broadcasted_iota(jnp.int32, loss.shape, 1)
        loss = jnp.where(rows * _LANES + lanes < valid, loss, 0.0)

    # Per-step reduce to a single lane-vector: tiny writeback, tiny final XLA reduce.
    o_ref[...] += jnp.sum(loss, axis=0, keepdims=True)


def _bce_kernel(x_ref, y_ref, o_ref, *, pb_per_g, rows_block, valid, needs_mask):
    """Binary CE with logits, per-lane partial sums (log1p form, f32 math)."""
    p = pl.program_id(1)

    @pl.when(p == 0)
    def _():
        o_ref[...] = jnp.zeros_like(o_ref)

    x = x_ref[...].astype(jnp.float32)                    # (RB, 128)
    y = y_ref[...].astype(jnp.float32)
    loss = jnp.maximum(x, 0.0) - x * y + jnp.log1p(jnp.exp(-jnp.abs(x)))

    if needs_mask:
        g = pl.program_id(0)
        row0 = (g * pb_per_g + p) * rows_block
        rows = row0 + jax.lax.broadcasted_iota(jnp.int32, loss.shape, 0)
        lanes = jax.lax.broadcasted_iota(jnp.int32, loss.shape, 1)
        loss = jnp.where(rows * _LANES + lanes < valid, loss, 0.0)

    o_ref[...] += jnp.sum(loss, axis=0, keepdims=True)


# --------------------------------- wrappers ------------------------------------

def _ce_path(y_pred, y_true):
    N, C, H, W = y_pred.shape
    assert y_true.shape == y_pred.shape, "C>1 path needs channelwise y_true (argmax over C)"
    L = H * W
    P = N * L

    n_rows = -(-L // _LANES)                                         # 128-pixel rows per n
    f32_row_bytes = _LANES * C * (max(y_pred.dtype.itemsize, 4) +
                                  max(y_true.dtype.itemsize, 4))
    G, RB, PB, R_pad = _tiling(n_rows, f32_row_bytes, N)
    L_pad = R_pad * _LANES
    needs_mask = (L_pad != L)

    logits = y_pred.reshape(N, C, L)                                 # free reshapes
    targets = y_true.reshape(N, C, L)
    if needs_mask:
        pad = ((0, 0), (0, 0), (0, L_pad - L))
        logits = jnp.pad(logits, pad)
        targets = jnp.pad(targets, pad)
    logits = logits.reshape(N, C, R_pad, _LANES)
    targets = targets.reshape(N, C, R_pad, _LANES)

    kernel = functools.partial(_ce_kernel, pb_per_g=PB, rows_block=RB,
                               valid=L, needs_mask=needs_mask)
    out = pl.pallas_call(
        kernel,
        out_shape=jax.ShapeDtypeStruct((N, G, 1, _LANES), jnp.float32),
        grid=(N, G, PB),
        in_specs=[pl.BlockSpec((None, C, RB, _LANES), lambda n, g, p: (n, 0, g * PB + p, 0)),
                  pl.BlockSpec((None, C, RB, _LANES), lambda n, g, p: (n, 0, g * PB + p, 0))],
        out_specs=pl.BlockSpec((None, None, 1, _LANES), lambda n, g, p: (n, g, 0, 0)),
        compiler_params=pltpu.CompilerParams(
            dimension_semantics=("parallel", "parallel", "arbitrary"),
            vmem_limit_bytes=_vmem_limit_bytes()),
    )(logits, targets)
    return jnp.sum(out) / jnp.float32(P)


def _bce_path(y_pred, y_true):
    P = y_pred.size
    assert y_true.size == P, "binary path needs N*H*W target elements"
    x = y_pred.reshape(-1)
    y = y_true.reshape(-1)

    n_rows = -(-P // _LANES)
    f32_row_bytes = _LANES * (max(y_pred.dtype.itemsize, 4) +
                              max(y_true.dtype.itemsize, 4))
    G, RB, PB, R_pad = _tiling(n_rows, f32_row_bytes, 1)
    P_pad = R_pad * _LANES
    needs_mask = (P_pad != P)
    if needs_mask:
        x = jnp.pad(x, (0, P_pad - P))
        y = jnp.pad(y, (0, P_pad - P))
    x = x.reshape(R_pad, _LANES)
    y = y.reshape(R_pad, _LANES)

    kernel = functools.partial(_bce_kernel, pb_per_g=PB, rows_block=RB,
                               valid=P, needs_mask=needs_mask)
    out = pl.pallas_call(
        kernel,
        out_shape=jax.ShapeDtypeStruct((G, 1, _LANES), jnp.float32),
        grid=(G, PB),
        in_specs=[pl.BlockSpec((RB, _LANES), lambda g, p: (g * PB + p, 0)),
                  pl.BlockSpec((RB, _LANES), lambda g, p: (g * PB + p, 0))],
        out_specs=pl.BlockSpec((None, 1, _LANES), lambda g, p: (g, 0, 0)),
        compiler_params=pltpu.CompilerParams(
            dimension_semantics=("parallel", "arbitrary"),
            vmem_limit_bytes=_vmem_limit_bytes()),
    )(x, y)
    return jnp.sum(out) / jnp.float32(P)


def celoss_forward(y_pred, y_true, ignore=None):
    """Pallas implementation of CELoss.forward (ignore=None path).

    y_pred: (N, C, H, W)
    y_true: (N, C, H, W) for C > 1 (argmax over channel, as in the torch code)
            (N, 1, H, W) or (N, H, W) for C == 1
    Returns: scalar mean loss (float32).
    """
    assert ignore is None, "ignore path not implemented"  # TODO(synk)
    if y_pred.shape[1] == 1:
        return _bce_path(y_pred, y_true)
    return _ce_path(y_pred, y_true)


# ---------------- pure-JAX references (for correctness check) ----------------

def _ref_multiclass(y_pred, y_true):
    tgt = jnp.argmax(y_true, axis=1)                       # (N, H, W)
    logp = jax.nn.log_softmax(y_pred.astype(jnp.float32), axis=1)
    picked = jnp.take_along_axis(logp, tgt[:, None], axis=1)[:, 0]
    return jnp.mean(-picked)


def _ref_binary(y_pred, y_true):
    x = y_pred.astype(jnp.float32)
    y = y_true.astype(jnp.float32)
    loss = jnp.maximum(x, 0.0) - x * y + jnp.log1p(jnp.exp(-jnp.abs(x)))
    return jnp.mean(loss)


if __name__ == "__main__":
    key = jax.random.PRNGKey(0)
    k1, k2, k3, k4 = jax.random.split(key, 4)

    # ---- multi-class case: N=2, C=4, H=W=16 ----
    N, C, H, W = 2, 4, 16, 16
    y_pred = jax.random.normal(k1, (N, C, H, W), dtype=jnp.float32)
    cls = jax.random.randint(k2, (N, H, W), 0, C)
    y_true = jax.nn.one_hot(cls, C, axis=1, dtype=jnp.float32)   # (N, C, H, W)

    loss_mc = jax.block_until_ready(celoss_forward(y_pred, y_true))
    ref_mc = _ref_multiclass(y_pred, y_true)
    assert jnp.allclose(loss_mc, ref_mc, rtol=1e-5, atol=1e-5), (loss_mc, ref_mc)

    # ---- binary case: N=2, C=1, H=W=16 ----
    yb_pred = jax.random.normal(k3, (N, 1, H, W), dtype=jnp.float32)
    yb_true = (jax.random.uniform(k4, (N, 1, H, W)) > 0.5).astype(jnp.float32)

    loss_bin = jax.block_until_ready(celoss_forward(yb_pred, yb_true))
    ref_bin = _ref_binary(yb_pred, yb_true)
    assert jnp.allclose(loss_bin, ref_bin, rtol=1e-5, atol=1e-5), (loss_bin, ref_bin)

    print("KERNEL_OK")
</pallas_src>

<mosaic_0001>
module attributes {stable_mosaic.version = 11 : i64} {
  func.func @_ce_kernel(%arg0: i32, %arg1: i32, %arg2: i32, %arg3: memref<1x4x8x128xf32, #tpu.memory_space<vmem>>, %arg4: memref<1x4x8x128xf32, #tpu.memory_space<vmem>>, %arg5: memref<1x1x1x128xf32, #tpu.memory_space<vmem>>) attributes {dimension_semantics = [#tpu.dimension_semantics<parallel>, #tpu.dimension_semantics<parallel>, #tpu.dimension_semantics<arbitrary>], iteration_bounds = array<i64: 2, 1, 1>, scalar_prefetch = 0 : i64, scratch_operands = 0 : i64, tpu.core_type = #tpu.core_type<tc>, window_params = [{transform_indices = @transform_0, window_bounds = array<i64: 1, 4, 8, 128>}, {transform_indices = @transform_1, window_bounds = array<i64: 1, 4, 8, 128>}, {transform_indices = @transform_2, window_bounds = array<i64: 1, 1, 1, 128>}]} {
    %c0_i32 = arith.constant 0 : i32
    %0 = arith.cmpi eq, %arg2, %c0_i32 : i32
    %1 = arith.extui %0 : i1 to i32
    %c0_i32_0 = arith.constant 0 : i32
    %2 = arith.cmpi ne, %1, %c0_i32_0 : i32
    scf.if %2 {
      %cst_17 = arith.constant 0.000000e+00 : f32
      %90 = vector.broadcast %cst_17 : f32 to vector<1x128xf32>
      %c0_18 = arith.constant 0 : index
      %c0_19 = arith.constant 0 : index
      %c0_20 = arith.constant 0 : index
      %c0_21 = arith.constant 0 : index
      %91 = vector.load %arg5[%c0_18, %c0_19, %c0_20, %c0_21] : memref<1x1x1x128xf32, #tpu.memory_space<vmem>>, vector<1x1x1x128xf32>
      %92 = vector.shape_cast %91 : vector<1x1x1x128xf32> to vector<1x128xf32>
      %93 = vector.shape_cast %90 : vector<1x128xf32> to vector<1x1x1x128xf32>
      tpu.vector_store %arg5[%c0_18, %c0_19, %c0_20, %c0_21], %93 {strides = array<i32>} : memref<1x1x1x128xf32, #tpu.memory_space<vmem>>, vector<1x1x1x128xf32>,
    } else {
    }
    %c0 = arith.constant 0 : index
    %c0_1 = arith.constant 0 : index
    %c0_2 = arith.constant 0 : index
    %c0_3 = arith.constant 0 : index
    %3 = vector.load %arg3[%c0, %c0_1, %c0_2, %c0_3] : memref<1x4x8x128xf32, #tpu.memory_space<vmem>>, vector<1x4x8x128xf32>
    %4 = vector.shape_cast %3 : vector<1x4x8x128xf32> to vector<4x8x128xf32>
    %c0_4 = arith.constant 0 : index
    %c0_5 = arith.constant 0 : index
    %c0_6 = arith.constant 0 : index
    %c0_7 = arith.constant 0 : index
    %5 = vector.load %arg4[%c0_4, %c0_5, %c0_6, %c0_7] : memref<1x4x8x128xf32, #tpu.memory_space<vmem>>, vector<1x4x8x128xf32>
    %6 = vector.shape_cast %5 : vector<1x4x8x128xf32> to vector<4x8x128xf32>
    %7 = vector.extract_strided_slice %6 {offsets = [0, 0, 0], sizes = [1, 8, 128], strides = [1, 1, 1]} : vector<4x8x128xf32> to vector<1x8x128xf32>
    %8 = vector.shape_cast %7 : vector<1x8x128xf32> to vector<8x128xf32>
    %9 = vector.extract_strided_slice %4 {offsets = [0, 0, 0], sizes = [1, 8, 128], strides = [1, 1, 1]} : vector<4x8x128xf32> to vector<1x8x128xf32>
    %10 = vector.shape_cast %9 : vector<1x8x128xf32> to vector<8x128xf32>
    %11 = vector.extract_strided_slice %4 {offsets = [0, 0, 0], sizes = [1, 8, 128], strides = [1, 1, 1]} : vector<4x8x128xf32> to vector<1x8x128xf32>
    %12 = vector.shape_cast %11 : vector<1x8x128xf32> to vector<8x128xf32>
    %13 = vector.extract_strided_slice %6 {offsets = [1, 0, 0], sizes = [1, 8, 128], strides = [1, 1, 1]} : vector<4x8x128xf32> to vector<1x8x128xf32>
    %14 = vector.shape_cast %13 : vector<1x8x128xf32> to vector<8x128xf32>
    %15 = arith.cmpf ogt, %14, %8 : vector<8x128xf32>
    %16 = vector.extract_strided_slice %6 {offsets = [1, 0, 0], sizes = [1, 8, 128], strides = [1, 1, 1]} : vector<4x8x128xf32> to vector<1x8x128xf32>
    %17 = vector.shape_cast %16 : vector<1x8x128xf32> to vector<8x128xf32>
    %18 = arith.select %15, %17, %8 : vector<8x128xi1>, vector<8x128xf32>
    %19 = vector.extract_strided_slice %4 {offsets = [1, 0, 0], sizes = [1, 8, 128], strides = [1, 1, 1]} : vector<4x8x128xf32> to vector<1x8x128xf32>
    %20 = vector.shape_cast %19 : vector<1x8x128xf32> to vector<8x128xf32>
    %21 = arith.select %15, %20, %10 : vector<8x128xi1>, vector<8x128xf32>
    %22 = vector.extract_strided_slice %4 {offsets = [1, 0, 0], sizes = [1, 8, 128], strides = [1, 1, 1]} : vector<4x8x128xf32> to vector<1x8x128xf32>
    %23 = vector.shape_cast %22 : vector<1x8x128xf32> to vector<8x128xf32>
    %24 = arith.maximumf %12, %23 : vector<8x128xf32>
    %25 = vector.extract_strided_slice %6 {offsets = [2, 0, 0], sizes = [1, 8, 128], strides = [1, 1, 1]} : vector<4x8x128xf32> to vector<1x8x128xf32>
    %26 = vector.shape_cast %25 : vector<1x8x128xf32> to vector<8x128xf32>
    %27 = arith.cmpf ogt, %26, %18 : vector<8x128xf32>
    %28 = vector.extract_strided_slice %6 {offsets = [2, 0, 0], sizes = [1, 8, 128], strides = [1, 1, 1]} : vector<4x8x128xf32> to vector<1x8x128xf32>
    %29 = vector.shape_cast %28 : vector<1x8x128xf32> to vector<8x128xf32>
    %30 = arith.select %27, %29, %18 : vector<8x128xi1>, vector<8x128xf32>
    %31 = vector.extract_strided_slice %4 {offsets = [2, 0, 0], sizes = [1, 8, 128], strides = [1, 1, 1]} : vector<4x8x128xf32> to vector<1x8x128xf32>
    %32 = vector.shape_cast %31 : vector<1x8x128xf32> to vector<8x128xf32>
    %33 = arith.select %27, %32, %21 : vector<8x128xi1>, vector<8x128xf32>
    %34 = vector.extract_strided_slice %4 {offsets = [2, 0, 0], sizes = [1, 8, 128], strides = [1, 1, 1]} : vector<4x8x128xf32> to vector<1x8x128xf32>
    %35 = vector.shape_cast %34 : vector<1x8x128xf32> to vector<8x128xf32>
    %36 = arith.maximumf %24, %35 : vector<8x128xf32>
    %37 = vector.extract_strided_slice %6 {offsets = [3, 0, 0], sizes = [1, 8, 128], strides = [1, 1, 1]} : vector<4x8x128xf32> to vector<1x8x128xf32>
    %38 = vector.shape_cast %37 : vector<1x8x128xf32> to vector<8x128xf32>
    %39 = arith.cmpf ogt, %38, %30 : vector<8x128xf32>
    %40 = vector.extract_strided_slice %4 {offsets = [3, 0, 0], sizes = [1, 8, 128], strides = [1, 1, 1]} : vector<4x8x128xf32> to vector<1x8x128xf32>
    %41 = vector.shape_cast %40 : vector<1x8x128xf32> to vector<8x128xf32>
    %42 = arith.select %39, %41, %33 : vector<8x128xi1>, vector<8x128xf32>
    %43 = vector.extract_strided_slice %4 {offsets = [3, 0, 0], sizes = [1, 8, 128], strides = [1, 1, 1]} : vector<4x8x128xf32> to vector<1x8x128xf32>
    %44 = vector.shape_cast %43 : vector<1x8x128xf32> to vector<8x128xf32>
    %45 = arith.maximumf %36, %44 : vector<8x128xf32>
    %46 = vector.extract_strided_slice %4 {offsets = [0, 0, 0], sizes = [1, 8, 128], strides = [1, 1, 1]} : vector<4x8x128xf32> to vector<1x8x128xf32>
    %47 = vector.shape_cast %46 : vector<1x8x128xf32> to vector<8x128xf32>
    %48 = arith.subf %47, %45 : vector<8x128xf32>
    %49 = math.exp %48 : vector<8x128xf32>
    %50 = vector.extract_strided_slice %4 {offsets = [1, 0, 0], sizes = [1, 8, 128], strides = [1, 1, 1]} : vector<4x8x128xf32> to vector<1x8x128xf32>
    %51 = vector.shape_cast %50 : vector<1x8x128xf32> to vector<8x128xf32>
    %52 = arith.subf %51, %45 : vector<8x128xf32>
    %53 = math.exp %52 : vector<8x128xf32>
    %54 = arith.addf %49, %53 : vector<8x128xf32>
    %55 = vector.extract_strided_slice %4 {offsets = [2, 0, 0], sizes = [1, 8, 128], strides = [1, 1, 1]} : vector<4x8x128xf32> to vector<1x8x128xf32>
    %56 = vector.shape_cast %55 : vector<1x8x128xf32> to vector<8x128xf32>
    %57 = arith.subf %56, %45 : vector<8x128xf32>
    %58 = math.exp %57 : vector<8x128xf32>
    %59 = arith.addf %54, %58 : vector<8x128xf32>
    %60 = vector.extract_strided_slice %4 {offsets = [3, 0, 0], sizes = [1, 8, 128], strides = [1, 1, 1]} : vector<4x8x128xf32> to vector<1x8x128xf32>
    %61 = vector.shape_cast %60 : vector<1x8x128xf32> to vector<8x128xf32>
    %62 = arith.subf %61, %45 : vector<8x128xf32>
    %63 = math.exp %62 : vector<8x128xf32>
    %64 = arith.addf %59, %63 : vector<8x128xf32>
    %65 = math.log %64 : vector<8x128xf32>
    %66 = arith.addf %45, %65 : vector<8x128xf32>
    %67 = arith.subf %66, %42 : vector<8x128xf32>
    %c1_i32 = arith.constant 1 : i32
    %68 = arith.muli %arg1, %c1_i32 : i32
    %69 = arith.addi %68, %arg2 : i32
    %c8_i32 = arith.constant 8 : i32
    %70 = arith.muli %69, %c8_i32 : i32
    %71 = tpu.iota {dimensions = array<i32: 0>} : vector<8x128xi32>
    %72 = vector.broadcast %70 : i32 to vector<8x128xi32>
    %73 = arith.addi %72, %71 : vector<8x128xi32>
    %74 = tpu.iota {dimensions = array<i32: 1>} : vector<8x128xi32>
    %c128_i32 = arith.constant 128 : i32
    %75 = vector.broadcast %c128_i32 : i32 to vector<8x128xi32>
    %76 = arith.muli %73, %75 : vector<8x128xi32>
    %77 = arith.addi %76, %74 : vector<8x128xi32>
    %c256_i32 = arith.constant 256 : i32
    %78 = vector.broadcast %c256_i32 : i32 to vector<8x128xi32>
    %79 = arith.cmpi slt, %77, %78 : vector<8x128xi32>
    %cst = arith.constant 0.000000e+00 : f32
    %80 = vector.broadcast %cst : f32 to vector<8x128xf32>
    %81 = arith.select %79, %67, %80 : vector<8x128xi1>, vector<8x128xf32>
    %c0_8 = arith.constant 0 : index
    %c0_9 = arith.constant 0 : index
    %c0_10 = arith.constant 0 : index
    %c0_11 = arith.constant 0 : index
    %82 = vector.load %arg5[%c0_8, %c0_9, %c0_10, %c0_11] : memref<1x1x1x128xf32, #tpu.memory_space<vmem>>, vector<1x1x1x128xf32>
    %83 = vector.shape_cast %82 : vector<1x1x1x128xf32> to vector<1x128xf32>
    %cst_12 = arith.constant dense<0.000000e+00> : vector<128xf32>
    %84 = vector.multi_reduction <add>, %81, %cst_12 [0] : vector<8x128xf32> to vector<128xf32>
    %85 = vector.shape_cast %84 : vector<128xf32> to vector<1x128xf32>
    %86 = arith.addf %83, %85 : vector<1x128xf32>
    %c0_13 = arith.constant 0 : index
    %c0_14 = arith.constant 0 : index
    %c0_15 = arith.constant 0 : index
    %c0_16 = arith.constant 0 : index
    %87 = vector.load %arg5[%c0_13, %c0_14, %c0_15, %c0_16] : memref<1x1x1x128xf32, #tpu.memory_space<vmem>>, vector<1x1x1x128xf32>
    %88 = vector.shape_cast %87 : vector<1x1x1x128xf32> to vector<1x128xf32>
    %89 = vector.shape_cast %86 : vector<1x128xf32> to vector<1x1x1x128xf32>
    tpu.vector_store %arg5[%c0_13, %c0_14, %c0_15, %c0_16], %89 {strides = array<i32>} : memref<1x1x1x128xf32, #tpu.memory_space<vmem>>, vector<1x1x1x128xf32>,
    return
  }
  func.func @transform_0(%arg0: i32, %arg1: i32, %arg2: i32) -> (i32, i32, i32, i32) {
    %c1_i32 = arith.constant 1 : i32
    %0 = arith.muli %arg1, %c1_i32 : i32
    %1 = arith.addi %0, %arg2 : i32
    %c0_i32 = arith.constant 0 : i32
    %c0_i32_0 = arith.constant 0 : i32
    %c0_i32_1 = arith.constant 0 : i32
    return %arg0, %c0_i32, %1, %c0_i32_0 : i32, i32, i32, i32
  }
  func.func @transform_1(%arg0: i32, %arg1: i32, %arg2: i32) -> (i32, i32, i32, i32) {
    %c1_i32 = arith.constant 1 : i32
    %0 = arith.muli %arg1, %c1_i32 : i32
    %1 = arith.addi %0, %arg2 : i32
    %c0_i32 = arith.constant 0 : i32
    %c0_i32_0 = arith.constant 0 : i32
    %c0_i32_1 = arith.constant 0 : i32
    return %arg0, %c0_i32, %1, %c0_i32_0 : i32, i32, i32, i32
  }
  func.func @transform_2(%arg0: i32, %arg1: i32, %arg2: i32) -> (i32, i32, i32, i32) {
    %c0_i32 = arith.constant 0 : i32
    %c0_i32_0 = arith.constant 0 : i32
    %c0_i32_1 = arith.constant 0 : i32
    return %arg0, %arg1, %c0_i32, %c0_i32_0 : i32, i32, i32, i32
  }
}

</mosaic_0001>

<llo_original>
// kernel: tpu_custom_call.1
$region0: #{tpu_custom_call.1}
  #allocation0 [shape = 'u32[]', space=smem, size = 0x4, offset = 0x4, fixed_abs, tag = 'smem constant byte address 0x4 - core index']
  #allocation1 [shape = 'u32[144,128]{1,0:T(1,128)}', space=vmem, size = 0x12000, scoped, tag = 'internal scratch']
  %s0 = inlined_call_operand.hbm [shape: f32[2,4,8,128], index: 0, kind: input, shape index: {}]
  %s1 = inlined_call_operand.hbm [shape: f32[2,4,8,128], index: 1, kind: input, shape index: {}]
  %s2 = inlined_call_operand.hbm [shape: f32[2,1,1,128], index: 2, kind: output, shape index: {}]
  %s3 = sld [smem:[#allocation0]]
  $region53: #{tpu_custom_call.1} parent=0
    _
  %s5 = ssub.s32 1, %s3
  %s6 = scalar_select 0, %s5, %s3
  $region1: #{tpu_custom_call.1} parent=0
    #allocation2 [shape = 'u8[32768]{0}', space=vmem, size = 0x8000, scoped, tag = 'input window, operand 0']
    #allocation3 [shape = 's32[2]{0}', space=sflag, size = 0x8, scoped, tag = 'scoped memory for tpu_custom_call.1']
    #allocation4 [shape = 's32[2]{0}', space=sflag, size = 0x8, scoped, tag = 'scoped memory for tpu_custom_call.1']
    #allocation5 [shape = 'u8[32768]{0}', space=vmem, size = 0x8000, scoped, tag = 'input window, operand 1']
    #allocation6 [shape = 's32[2]{0}', space=sflag, size = 0x8, scoped, tag = 'scoped memory for tpu_custom_call.1']
    #allocation7 [shape = 'u8[1024]{0}', space=vmem, size = 0x400, scoped, tag = 'output window, operand 0']
    %7 = vsyncpa [#allocation3], 0
    %s8 = scalar_lea.sflag [#allocation3], 1
    %9 = vsyncpa %s8, 0
    %10 = vsyncpa [#allocation6], 0
    %s11 = scalar_lea.sflag [#allocation6], 1
    %12 = vsyncpa %s11, 0
    %13 = vsyncpa [#allocation4], 0
    %s14 = scalar_lea.sflag [#allocation4], 1
    %15 = vsyncpa %s14, 0
    loop: start=0, step=1, limit=4
    $region2: #{tpu_custom_call.1} parent=1 // loop_pre_header
      _
    $region3: #{tpu_custom_call.1} parent=1 // loop_header
      %s17 = sphi 0, %s21
      %p18 = scmp.ge.s32.totalorder %s17, 4
      %s24 = sphi 0, %s43
      %s25 = sphi 0, %s39
      %s26 = sphi 0, %s35
      %s27 = sphi 0, %s24
      %s28 = sphi 0, %s25
      %s29 = sphi 0, %s26
      %s30 = sphi 0, %s27
      %s31 = sphi 0, %s28
      %s32 = sphi 0, %s29
      %s50 = sphi 0, %s52
      %s53 = sphi 0, %s50
      %s54 = sphi 0, %s53
      %s70 = sphi 0, %s54
      %s80 = sphi 0, %s82
      %s83 = sphi 0, %s80
      %s84 = sphi 0, %s83
      %s100 = sphi 0, %s84
      %s108 = sphi 0, %s110
      %s111 = sphi 0, %s108
      %s112 = sphi 0, %s111
      %s128 = sphi 0, %s112
    $region4: #{tpu_custom_call.1} parent=1 // loop_header_branch
      %20 = sbr.rel (%p18) target = $region8
    $region5: #{tpu_custom_call.1} parent=1 // loop_body
      %s22 = ssub.s32 %s17, 1
      %s23 = ssub.s32 %s17, 2
      %s33 = sadd.s32 1, %s26
      %p34 = scmp.ge.s32.totalorder %s33, 1
      %s35 = scalar_select %p34, 0, %s33
      %s36 = sadd.s32 1, %s25
      %s37 = scalar_select %p34, %s36, %s25
      %p38 = scmp.ge.s32.totalorder %s37, 1
      %s39 = scalar_select %p38, 0, %s37
      %s40 = sadd.s32 1, %s24
      %s41 = scalar_select %p38, %s40, %s24
      %p42 = scmp.ge.s32.totalorder %s41, 2
      %s43 = scalar_select %p42, 0, %s41
      %s44 = sadd.s32 %s25, %s26
      %s45 = sadd.s32 %s39, %s35
      %s46 = ssub.s32 %s24, %s43
      %s47 = ssub.s32 %s44, %s45
      %s48 = sor.u32 %s46, %s47
      %p49 = scmp.eq.s32.totalorder %s48, 0
      %s51 = sadd.s32 %s50, 1
      %s52 = scalar_select %p49, %s50, %s51
      %p55 = pneg %p49
      %p56 = scmp.eq.s32.totalorder %s17, 1
      %p57 = por %p55, %p56
      %p58 = scmp.ne.s32.totalorder %s50, %s53
      %p59 = scmp.eq.s32.totalorder %s17, 0
      %p60 = por %p58, %p59
      %p61 = scmp.ne.s32.totalorder %s50, %s53
      %p62 = scmp.eq.s32.totalorder %s22, 1
      %p63 = por %p61, %p62
      %p64 = scmp.ne.s32.totalorder %s53, %s54
      %p65 = scmp.eq.s32.totalorder %s22, 0
      %p66 = por %p64, %p65
      %p67 = scmp.ne.s32.totalorder %s53, %s54
      %p68 = scmp.eq.s32.totalorder %s23, 1
      %p69 = por %p67, %p68
      %p71 = scmp.ne.s32.totalorder %s54, %s70
      %p72 = scmp.eq.s32.totalorder %s23, 0
      %p73 = por %p71, %p72
      %s74 = sadd.s32 %s25, %s26
      %s75 = sadd.s32 %s39, %s35
      %s76 = ssub.s32 %s24, %s43
      %s77 = ssub.s32 %s74, %s75
      %s78 = sor.u32 %s76, %s77
      %p79 = scmp.eq.s32.totalorder %s78, 0
      %s81 = sadd.s32 %s80, 1
      %s82 = scalar_select %p79, %s80, %s81
      %p85 = pneg %p79
      %p86 = scmp.eq.s32.totalorder %s17, 1
      %p87 = por %p85, %p86
      %p88 = scmp.ne.s32.totalorder %s80, %s83
      %p89 = scmp.eq.s32.totalorder %s17, 0
      %p90 = por %p88, %p89
      %p91 = scmp.ne.s32.totalorder %s80, %s83
      %p92 = scmp.eq.s32.totalorder %s22, 1
      %p93 = por %p91, %p92
      %p94 = scmp.ne.s32.totalorder %s83, %s84
      %p95 = scmp.eq.s32.totalorder %s22, 0
      %p96 = por %p94, %p95
      %p97 = scmp.ne.s32.totalorder %s83, %s84
      %p98 = scmp.eq.s32.totalorder %s23, 1
      %p99 = por %p97, %p98
      %p101 = scmp.ne.s32.totalorder %s84, %s100
      %p102 = scmp.eq.s32.totalorder %s23, 0
      %p103 = por %p101, %p102
      %s104 = ssub.s32 %s24, %s43
      %s105 = ssub.s32 %s25, %s39
      %s106 = sor.u32 %s104, %s105
      %p107 = scmp.eq.s32.totalorder %s106, 0
      %s109 = sadd.s32 %s108, 1
      %s110 = scalar_select %p107, %s108, %s109
      %p113 = pneg %p107
      %p114 = scmp.eq.s32.totalorder %s17, 1
      %p115 = por %p113, %p114
      %p116 = scmp.ne.s32.totalorder %s108, %s111
      %p117 = scmp.eq.s32.totalorder %s17, 0
      %p118 = por %p116, %p117
      %p119 = scmp.ne.s32.totalorder %s108, %s111
      %p120 = scmp.eq.s32.totalorder %s22, 1
      %p121 = por %p119, %p120
      %p122 = scmp.ne.s32.totalorder %s111, %s112
      %p123 = scmp.eq.s32.totalorder %s22, 0
      %p124 = por %p122, %p123
      %p125 = scmp.ne.s32.totalorder %s111, %s112
      %p126 = scmp.eq.s32.totalorder %s23, 1
      %p127 = por %p125, %p126
      %p129 = scmp.ne.s32.totalorder %s112, %s128
      %p130 = scmp.eq.s32.totalorder %s23, 0
      %p131 = por %p129, %p130
      %p132 = scmp.le.s32.totalorder 1, %s17
      %p133 = scmp.lt.s32.totalorder %s17, 3
      %p134 = pnand %p132, %p133
      %p135 = pneg %p134
      // Predicated region
      $region9: #{tpu_custom_call.1} parent=5 // pred_check
        _
      $region10: #{tpu_custom_call.1} parent=5 // pred_check_branch
        %137 = sbr.rel (%p134) target = $region12
      $region11: #{tpu_custom_call.1} parent=5 // pred_region
        %s138 = ssub.s32 %s17, 1
      $region12: #{tpu_custom_call.1} parent=5 // pred_fallthru
        _
      %p139 = scmp.lt.s32.totalorder %s17, 2
      // Predicated region
      $region13: #{tpu_custom_call.1} parent=5 // pred_check
        %p140 = pneg %p139
      $region14: #{tpu_custom_call.1} parent=5 // pred_check_branch
        %142 = sbr.rel (%p140) target = $region16
      $region15: #{tpu_custom_call.1} parent=5 // pred_region
        // Predicated region
        $region17: #{tpu_custom_call.1} parent=15 // pred_check
          %p143 = pneg %p60
        $region18: #{tpu_custom_call.1} parent=15 // pred_check_branch
          %145 = sbr.rel (%p143) target = $region20
        $region19: #{tpu_custom_call.1} parent=15 // pred_region
          %s146 = sand.u32 %s50, 1
          %s147 = scalar_lea.sflag [#allocation3], %s146
          %s148 = sand.u32 %s50, 1
          %s149 = smul.addr %s148, 32
          %s150 = scalar_lea.vmem [#allocation2], %s149
          %s151 = sadd.s32 %s25, %s26
          %s153 = ssub.s32 512, 512
          %154 = vsyncadd %s147, %s153
          %s155 = smul.addr %s24, 4
          %s156 = sadd.s32 %s151, %s155
          %s157 = smul.addr %s156, 128
          %s158 = scalar_lea.hbm %s0, %s157
          %s159 = sshll.u32 %s150, 4
          %s160 = int_to_ptr.vmem [resolvable:$true] %s159
          %165 = dma.hbm_to_vmem [thread:$0]  %s158, 512, %s160, %s147, 128, 128, 8
        $region20: #{tpu_custom_call.1} parent=15 // pred_fallthru
          _
        // Predicated region
        $region21: #{tpu_custom_call.1} parent=15 // pred_check
          %p166 = pneg %p90
        $region22: #{tpu_custom_call.1} parent=15 // pred_check_branch
          %168 = sbr.rel (%p166) target = $region24
        $region23: #{tpu_custom_call.1} parent=15 // pred_region
          %s169 = sand.u32 %s80, 1
          %s170 = scalar_lea.sflag [#allocation6], %s169
          %s171 = sand.u32 %s80, 1
          %s172 = smul.addr %s171, 32
          %s173 = scalar_lea.vmem [#allocation5], %s172
          %s174 = sadd.s32 %s25, %s26
          %s176 = ssub.s32 512, 512
          %177 = vsyncadd %s170, %s176
          %s178 = smul.addr %s24, 4
          %s179 = sadd.s32 %s174, %s178
          %s180 = smul.addr %s179, 128
          %s181 = scalar_lea.hbm %s1, %s180
          %s182 = sshll.u32 %s173, 4
          %s183 = int_to_ptr.vmem [resolvable:$true] %s182
          %188 = dma.hbm_to_vmem [thread:$0]  %s181, 512, %s183, %s170, 128, 128, 8
        $region24: #{tpu_custom_call.1} parent=15 // pred_fallthru
          _
      $region16: #{tpu_custom_call.1} parent=5 // pred_fallthru
        _
      %p189 = scmp.le.s32.totalorder 1, %s17
      %p190 = scmp.lt.s32.totalorder %s17, 3
      %p191 = pnand %p189, %p190
      %p192 = pneg %p191
      // Predicated region
      $region25: #{tpu_custom_call.1} parent=5 // pred_check
        _
      $region26: #{tpu_custom_call.1} parent=5 // pred_check_branch
        %194 = sbr.rel (%p191) target = $region28
      $region27: #{tpu_custom_call.1} parent=5 // pred_region
        %s195 = ssub.s32 %s17, 1
        %s196 = sand.u32 %s53, 1
        %s197 = scalar_lea.sflag [#allocation3], %s196
        %s198 = sand.u32 %s53, 1
        %s199 = smul.addr %s198, 32
        %s200 = scalar_lea.vmem [#allocation2], %s199
        // Predicated region
        $region29: #{tpu_custom_call.1} parent=27 // pred_check
          %p201 = pneg %p66
        $region30: #{tpu_custom_call.1} parent=27 // pred_check_branch
          %203 = sbr.rel (%p201) target = $region32
        $region31: #{tpu_custom_call.1} parent=27 // pred_region
          %204 = dma.done %s197, 512
        $region32: #{tpu_custom_call.1} parent=27 // pred_fallthru
          _
        %s205 = sand.u32 %s83, 1
        %s206 = scalar_lea.sflag [#allocation6], %s205
        %s207 = sand.u32 %s83, 1
        %s208 = smul.addr %s207, 32
        %s209 = scalar_lea.vmem [#allocation5], %s208
        // Predicated region
        $region33: #{tpu_custom_call.1} parent=27 // pred_check
          %p210 = pneg %p96
        $region34: #{tpu_custom_call.1} parent=27 // pred_check_branch
          %212 = sbr.rel (%p210) target = $region36
        $region35: #{tpu_custom_call.1} parent=27 // pred_region
          %213 = dma.done %s206, 512
        $region36: #{tpu_custom_call.1} parent=27 // pred_fallthru
          _
        %s214 = sand.u32 %s53, 1
        %s215 = scalar_lea.sflag [#allocation3], %s214
        %s216 = sand.u32 %s53, 1
        %s217 = smul.addr %s216, 32
        %s218 = scalar_lea.vmem [#allocation2], %s217
        %p219 = pneg %p66
        %p220 = pneg %p63
        %s221 = sand.u32 %s83, 1
        %s222 = scalar_lea.sflag [#allocation6], %s221
        %s223 = sand.u32 %s83, 1
        %s224 = smul.addr %s223, 32
        %s225 = scalar_lea.vmem [#allocation5], %s224
        %p226 = pneg %p96
        %p227 = pneg %p93
        %p228 = pneg %p124
        %p229 = pneg %p121
        %s230 = sand.u32 %s111, 1
        %s231 = scalar_lea.sflag [#allocation4], %s230
        %s232 = sand.u32 %s111, 1
        %s233 = scalar_lea.vmem [#allocation7], %s232
        %s234 = sadd.s32 %s28, %s29
        %s235 = sadd.s32 %s28, %s29
        %p236 = scmp.eq.s32.totalorder %s29, 0
        // Predicated region
        $region37: #{tpu_custom_call.1} parent=27 // pred_check
          %p237 = pneg %p236
        $region38: #{tpu_custom_call.1} parent=27 // pred_check_branch
          %239 = sbr.rel (%p237) target = $region40
        $region39: #{tpu_custom_call.1} parent=27 // pred_region
          %240 = vst [vmem:[%s233] sm:$0x1] 0.0
        $region40: #{tpu_custom_call.1} parent=27 // pred_fallthru
          _
        %v241 = vld [vmem:[%s200] sm:$0xff]
        %v242 = vld [vmem:[%s200 + $0x8] sm:$0xff]
        %v243 = vld [vmem:[%s200 + $0x10] sm:$0xff]
        %v244 = vld [vmem:[%s200 + $0x18] sm:$0xff]
        %v245 = vld [vmem:[%s209] sm:$0xff]
        %v246 = vld [vmem:[%s209 + $0x8] sm:$0xff]
        %v247 = vld [vmem:[%s209 + $0x10] sm:$0xff]
        %v248 = vld [vmem:[%s209 + $0x18] sm:$0xff]
        %vm249 = vcmp.gt.f32.partialorder %v246, %v245
        %v250 = vsel %vm249, %v246, %v245
        %v251 = vsel %vm249, %v242, %v241
        %v252 = vmax.f32 %v241, %v242
        %vm253 = vcmp.gt.f32.partialorder %v247, %v250
        %v254 = vsel %vm253, %v247, %v250
        %v255 = vsel %vm253, %v243, %v251
        %v256 = vmax.f32 %v252, %v243
        %vm257 = vcmp.gt.f32.partialorder %v248, %v254
        %v258 = vsel %vm257, %v244, %v255
        %v259 = vmax.f32 %v256, %v244
        %v260 = vsub.f32 %v241, %v259
        %v261 = vmul.f32 %v260, 1.442695
        %v262 = vpow.pop %v261
        %v263 = vsub.f32 %v242, %v259
        %v264 = vmul.f32 %v263, 1.442695
        %v265 = vpow.pop %v264
        %v266 = vadd.f32 %v262, %v265
        %v267 = vsub.f32 %v243, %v259
        %v268 = vmul.f32 %v267, 1.442695
        %v269 = vpow.pop %v268
        %v270 = vadd.f32 %v266, %v269
        %v271 = vsub.f32 %v244, %v259
        %v272 = vmul.f32 %v271, 1.442695
        %v273 = vpow.pop %v272
        %v274 = vadd.f32 %v270, %v273
        %v275 = vlog2.pop %v274
        %v276 = vmul.f32 %v275, 0.6931472
        %v277 = vadd.f32 %v259, %v276
        %v278 = vsub.f32 %v277, %v258
        %s279 = sadd.s32 %s28, %s29
        %s280 = smul.u32 %s279, 8
        %v281 = vlaneseq
        %v282 = vshrl.u32 %v281, 7
        %v283 = vstv %s280
        %v284 = vadd.s32 %v283, %v282
        %v285 = vlaneseq
        %v286 = vand.u32 %v285, 127
        %v287 = vmul.u32 %v284, 128
        %v288 = vadd.s32 %v287, %v286
        %vm289 = vcmp.lt.s32.totalorder %v288, 256
        %v290 = vsel %vm289, %v278, 0.0
        %v291 = vld [vmem:[%s233] sm:$0x1]
        %v292 = vrot.slane %v290, 4
        %v293 = vadd.f32 %v290, %v292
        %v294 = vrot.slane %v293, 2
        %v295 = vadd.f32 %v293, %v294
        %v296 = vrot.slane %v295, 1
        %v297 = vadd.f32 %v295, %v296
        %v298 = vadd.f32 %v291, %v297
        %299 = vst [vmem:[%s233] sm:$0x1] %v298
        %s300 = sand.u32 %s111, 1
        %s301 = scalar_lea.sflag [#allocation4], %s300
        %s302 = sand.u32 %s111, 1
        %s303 = scalar_lea.vmem [#allocation7], %s302
        // Predicated region
        $region41: #{tpu_custom_call.1} parent=27 // pred_check
          %p304 = pneg %p121
        $region42: #{tpu_custom_call.1} parent=27 // pred_check_branch
          %306 = sbr.rel (%p304) target = $region44
        $region43: #{tpu_custom_call.1} parent=27 // pred_region
          %s308 = ssub.s32 16, 16
          %309 = vsyncadd %s301, %s308
          %s310 = sadd.s32 %s28, %s27
          %s311 = smul.addr %s310, 16
          %s312 = scalar_lea.hbm %s2, %s311
          %s314 = sshll.u32 %s303, 4
          %s315 = int_to_ptr.vmem [resolvable:$true] %s314
          %317 = dma.vmem_to_hbm [thread:$0]  %s315, 16, %s312, %s301
        $region44: #{tpu_custom_call.1} parent=27 // pred_fallthru
          _
      $region28: #{tpu_custom_call.1} parent=5 // pred_fallthru
        _
      %p318 = scmp.le.s32.totalorder 2, %s17
      // Predicated region
      $region45: #{tpu_custom_call.1} parent=5 // pred_check
        %p319 = pneg %p318
      $region46: #{tpu_custom_call.1} parent=5 // pred_check_branch
        %321 = sbr.rel (%p319) target = $region48
      $region47: #{tpu_custom_call.1} parent=5 // pred_region
        %s322 = ssub.s32 %s17, 2
        // Predicated region
        $region49: #{tpu_custom_call.1} parent=47 // pred_check
          %p323 = pneg %p127
        $region50: #{tpu_custom_call.1} parent=47 // pred_check_branch
          %325 = sbr.rel (%p323) target = $region52
        $region51: #{tpu_custom_call.1} parent=47 // pred_region
          %s326 = sand.u32 %s112, 1
          %s327 = scalar_lea.sflag [#allocation4], %s326
          %s328 = sand.u32 %s112, 1
          %s329 = scalar_lea.vmem [#allocation7], %s328
          %330 = dma.done %s327, 16
        $region52: #{tpu_custom_call.1} parent=47 // pred_fallthru
          _
      $region48: #{tpu_custom_call.1} parent=5 // pred_fallthru
        _
    $region6: #{tpu_custom_call.1} parent=1 // loop_footer
      %s21 = sadd.s32 1, %s17
    $region7: #{tpu_custom_call.1} parent=1 // loop_footer_branch
      %16 = sbr.rel target = $region3
    $region8: #{tpu_custom_call.1} parent=1 // loop_exit
      _
    %331 = vsyncpa [#allocation3], 1
    %s332 = scalar_lea.sflag [#allocation3], 1
    %333 = vsyncpa %s332, 1
    %334 = vsyncpa [#allocation6], 1
    %s335 = scalar_lea.sflag [#allocation6], 1
    %336 = vsyncpa %s335, 1
    %337 = vsyncpa [#allocation4], 1
    %s338 = scalar_lea.sflag [#allocation4], 1
    %339 = vsyncpa %s338, 1

</llo_original>
